<compile_context>
chip_gen: v7x
topology: tpu7x:2x2x1
jax: 0.10.0
libtpu: 0.0.40
codegen_flags: <defaults>
</compile_context>

<pallas_src>
import numpy as np
import jax
import jax.numpy as jnp
from jax.experimental import pallas as pl
from jax.experimental.pallas import tpu as pltpu


# ---------------------------- irrep bookkeeping ----------------------------
MUL_IN = 32                         # multiplicity of each input irrep
LS = (0, 1, 2)                      # 32x0e + 32x1o + 32x2e
D_IN = sum(MUL_IN * (2 * l + 1) for l in LS)      # 288
K_ACTIVE = MUL_IN * (1 + 3)         # 128: only 0e + 1o rows carry weights
D_OUT = 1 + 3                       # 1x0e + 1x1o  (dipole_only=False)
W_LANES = 128                       # W kept lane-padded in VMEM (clean MXU lowering)


def _round_up(x, m):
    return ((x + m - 1) // m) * m


# ------------------------------ Pallas kernel ------------------------------
def linear_readout_kernel(x_ref, w_ref, o_ref):
    """One node tile: o = x_active @ W  (f32 in, f32 MXU accumulate)."""
    # x_ref: (tn, 128)  -- only the 0e/1o feature block (2e rows of W are 0)
    # w_ref: (128, 128) -- (K, D_OUT) zero-padded to 128 lanes, resident in VMEM
    # o_ref: (tn, 4)    -- skinny, fully contiguous output block
    acc = jnp.dot(x_ref[...], w_ref[...], preferred_element_type=jnp.float32)
    o_ref[...] = acc[:, :D_OUT]


def _choose_tn(n, tn_target):
    """Pick the node tile.

    Small inputs: a single tile equal to the full node dim (block == full
    array dim is always a legal block shape).  Large inputs: a big
    sublane-aligned tile, capped so the grid has >= 2 steps and v7x megacore
    (dimension_semantics=("parallel",)) can split work across both TCs.
    """
    if n <= 1024:
        return n
    return min(tn_target, _round_up(pl.cdiv(n, 2), 256))


def linear_dipole_readout(x, w_active, *, tn=2048):
    """x: [N, D_IN] f32, w_active: [K_ACTIVE, D_OUT] f32 -> [N, D_OUT] f32."""
    n, d_in = x.shape
    assert d_in == D_IN and w_active.shape == (K_ACTIVE, D_OUT)

    tn = _choose_tn(n, tn)
    grid = (pl.cdiv(n, tn),)

    # Zero-pad W's lane dim to 128 (64 KiB, stays resident in VMEM).
    w_pad = jnp.zeros((K_ACTIVE, W_LANES), jnp.float32).at[:, :D_OUT].set(
        w_active.astype(jnp.float32))

    cost = pl.CostEstimate(
        flops=2 * grid[0] * tn * K_ACTIVE * W_LANES,
        transcendentals=0,
        bytes_accessed=(n * K_ACTIVE * 4            # x (only active features)
                        + K_ACTIVE * W_LANES * 4    # weights
                        + n * D_OUT * 4))           # output

    out = pl.pallas_call(
        linear_readout_kernel,
        out_shape=jax.ShapeDtypeStruct((n, D_OUT), jnp.float32),
        grid_spec=pltpu.PrefetchScalarGridSpec(
            num_scalar_prefetch=0,
            grid=grid,
            in_specs=[
                # Only the first 128 (0e/1o) features of each node row are DMA'd.
                pl.BlockSpec((tn, K_ACTIVE), lambda i: (i, 0)),
                pl.BlockSpec((K_ACTIVE, W_LANES), lambda i: (0, 0)),
            ],
            out_specs=pl.BlockSpec((tn, D_OUT), lambda i: (i, 0)),
        ),
        compiler_params=pltpu.CompilerParams(
            dimension_semantics=("parallel",),
        ),
        cost_estimate=cost,
    )(x, w_pad)

    return out


# ------------------------- parameter construction --------------------------
def make_active_weight(key, dipole_only=False):
    """Dense (K_ACTIVE, D_OUT) weight for the e3nn Linear's active paths.

    Only 0e->0e and 1o->1o paths exist; each carries e3nn's 1/sqrt(fan_in)
    path normalization.  The 1o block assumes e3nn's mul-major feature layout
    ((mul, 3) flattened), which is the e3nn / MACE convention.
    """
    # TODO(synk): dipole_only=True (irreps_out = 1x1o) not exercised here.
    assert not dipole_only
    k0, k1 = jax.random.split(key)
    inv = 1.0 / np.sqrt(MUL_IN)

    dense = np.zeros((K_ACTIVE, D_OUT), dtype=np.float32)

    # 0e -> 0e path: rows 0:32, column 0.
    w0 = np.asarray(jax.random.normal(k0, (MUL_IN, 1), jnp.float32))
    dense[0:MUL_IN, 0:1] = w0 * inv

    # 1o -> 1o path: rows 32:128 laid out (mul, 3); kron(w1, I3).
    w1 = np.asarray(jax.random.normal(k1, (MUL_IN, 1), jnp.float32))
    block = np.kron(w1 * inv, np.eye(3, dtype=np.float32))      # (96, 3)
    dense[MUL_IN:MUL_IN + MUL_IN * 3, 1:4] = block

    return jnp.asarray(dense)


# --------------------------- pure-JAX reference -----------------------------
def reference_forward(x, w_active):
    # Full-f32 reference; 2e features contribute nothing (zero weight rows).
    return jnp.dot(x[:, :K_ACTIVE], w_active,
                   precision=jax.lax.Precision.HIGHEST)


# ----------------------------------- main -----------------------------------
if __name__ == "__main__":
    key = jax.random.PRNGKey(0)
    kx, kw = jax.random.split(key)

    n_nodes = 8
    x = jax.random.normal(kx, (n_nodes, D_IN), jnp.float32)
    w_active = make_active_weight(kw, dipole_only=False)

    out = linear_dipole_readout(x, w_active)
    out = jax.block_until_ready(out)

    ref = reference_forward(x, w_active)
    assert out.shape == (n_nodes, D_OUT)
    np.testing.assert_allclose(np.asarray(out), np.asarray(ref),
                               rtol=1e-3, atol=1e-3)
    print("KERNEL_OK")
</pallas_src>

<mosaic_0001>
module attributes {stable_mosaic.version = 11 : i64} {
  func.func @linear_readout_kernel(%arg0: i32, %arg1: memref<8x128xf32, #tpu.memory_space<vmem>>, %arg2: memref<128x128xf32, #tpu.memory_space<vmem>>, %arg3: memref<8x4xf32, #tpu.memory_space<vmem>>) attributes {dimension_semantics = [#tpu.dimension_semantics<parallel>], iteration_bounds = array<i64: 1>, scalar_prefetch = 0 : i64, scratch_operands = 0 : i64, tpu.core_type = #tpu.core_type<tc>, window_params = [{transform_indices = @transform_0, window_bounds = array<i64: 8, 128>}, {pipeline_mode = #tpu.pipeline_mode<synchronous>, transform_indices = @transform_1, window_bounds = array<i64: 128, 128>}, {transform_indices = @transform_2, window_bounds = array<i64: 8, 4>}]} {
    %c0 = arith.constant 0 : index
    %c0_0 = arith.constant 0 : index
    %0 = vector.load %arg1[%c0, %c0_0] : memref<8x128xf32, #tpu.memory_space<vmem>>, vector<8x128xf32>
    %c0_1 = arith.constant 0 : index
    %c0_2 = arith.constant 0 : index
    %1 = vector.load %arg2[%c0_1, %c0_2] : memref<128x128xf32, #tpu.memory_space<vmem>>, vector<128x128xf32>
    %cst = arith.constant dense<0.000000e+00> : vector<8x128xf32>
    %2 = tpu.matmul %0, %1, %cst {dimension_numbers = #tpu.dot_dimension_numbers<[1], [0], [0], [1], [0, 0, 1, 1], [], []>} : vector<8x128xf32>, vector<128x128xf32>, vector<8x128xf32> -> vector<8x128xf32>
    %3 = vector.extract_strided_slice %2 {offsets = [0, 0], sizes = [8, 4], strides = [1, 1]} : vector<8x128xf32> to vector<8x4xf32>
    %c0_3 = arith.constant 0 : index
    %c0_4 = arith.constant 0 : index
    %4 = vector.load %arg3[%c0_3, %c0_4] : memref<8x4xf32, #tpu.memory_space<vmem>>, vector<8x4xf32>
    tpu.vector_store %arg3[%c0_3, %c0_4], %3 {strides = array<i32>} : memref<8x4xf32, #tpu.memory_space<vmem>>, vector<8x4xf32>,
    return
  }
  func.func @transform_0(%arg0: i32) -> (i32, i32) {
    %c0_i32 = arith.constant 0 : i32
    %c0_i32_0 = arith.constant 0 : i32
    return %arg0, %c0_i32 : i32, i32
  }
  func.func @transform_1(%arg0: i32) -> (i32, i32) {
    %c0_i32 = arith.constant 0 : i32
    %c0_i32_0 = arith.constant 0 : i32
    %c0_i32_1 = arith.constant 0 : i32
    return %c0_i32, %c0_i32_0 : i32, i32
  }
  func.func @transform_2(%arg0: i32) -> (i32, i32) {
    %c0_i32 = arith.constant 0 : i32
    %c0_i32_0 = arith.constant 0 : i32
    return %arg0, %c0_i32 : i32, i32
  }
}

</mosaic_0001>

<llo_original>
// kernel: tpu_custom_call.1
$region0: #{tpu_custom_call.1}
  #allocation0 [shape = 'u32[]', space=smem, size = 0x4, offset = 0x4, fixed_abs, tag = 'smem constant byte address 0x4 - core index']
  #allocation1 [shape = 'u32[144,128]{1,0:T(1,128)}', space=vmem, size = 0x12000, scoped, tag = 'internal scratch']
  %s0 = inlined_call_operand.hbm [shape: f32[8,288], index: 0, kind: input, shape index: {}]
  %s1 = inlined_call_operand.hbm [shape: f32[128,128], index: 1, kind: input, shape index: {}]
  %s2 = inlined_call_operand.vmem [shape: f32[8,4], index: 2, kind: output, shape index: {}]
  %s3 = sld [smem:[#allocation0]]
  $region26: #{tpu_custom_call.1} parent=0
    _
  %s5 = ssub.s32 1, %s3
  %s6 = scalar_select 0, %s5, %s3
  $region1: #{tpu_custom_call.1} parent=0
    #allocation2 [shape = 'u8[4096]{0}', space=vmem, size = 0x1000, scoped, tag = 'input window, operand 0, single buffered']
    #allocation3 [shape = 's32[1]{0}', space=sflag, size = 0x4, scoped, tag = 'scoped memory for tpu_custom_call.1']
    #allocation4 [shape = 'u8[65536]{0}', space=vmem, size = 0x10000, scoped, tag = 'input window, operand 1, single buffered']
    #allocation5 [shape = 's32[1]{0}', space=sflag, size = 0x4, scoped, tag = 'scoped memory for tpu_custom_call.1']
    %7 = vsyncpa [#allocation3], 0
    %8 = vsyncpa [#allocation5], 0
    // Predicated region
    $region2: #{tpu_custom_call.1} parent=1 // pred_check
      _
    $region3: #{tpu_custom_call.1} parent=1 // pred_check_branch
      %10 = sbr.rel (0) target = $region5
    $region4: #{tpu_custom_call.1} parent=1 // pred_region
      %s12 = ssub.s32 128, 128
      %13 = vsyncadd [#allocation3], %s12
      %s15 = sshll.u32 [#allocation2], 4
      %s16 = int_to_ptr.vmem [resolvable:$true] %s15
      %18 = dma.hbm_to_vmem [thread:$0]  %s0, 128, %s16, [#allocation3]
    $region5: #{tpu_custom_call.1} parent=1 // pred_fallthru
      _
    // Predicated region
    $region6: #{tpu_custom_call.1} parent=1 // pred_check
      _
    $region7: #{tpu_custom_call.1} parent=1 // pred_check_branch
      %20 = sbr.rel (0) target = $region9
    $region8: #{tpu_custom_call.1} parent=1 // pred_region
      %s22 = ssub.s32 2048, 2048
      %23 = vsyncadd [#allocation5], %s22
      %s24 = sshll.u32 [#allocation4], 4
      %s25 = int_to_ptr.vmem [resolvable:$true] %s24
      %30 = dma.hbm_to_vmem [thread:$0]  %s1, 2048, %s25, [#allocation5], 128, 128, 8
    $region9: #{tpu_custom_call.1} parent=1 // pred_fallthru
      _
    // Predicated region
    $region10: #{tpu_custom_call.1} parent=1 // pred_check
      _
    $region11: #{tpu_custom_call.1} parent=1 // pred_check_branch
      %32 = sbr.rel (0) target = $region13
    $region12: #{tpu_custom_call.1} parent=1 // pred_region
      %33 = dma.done [#allocation3], 128
    $region13: #{tpu_custom_call.1} parent=1 // pred_fallthru
      _
    // Predicated region
    $region14: #{tpu_custom_call.1} parent=1 // pred_check
      _
    $region15: #{tpu_custom_call.1} parent=1 // pred_check_branch
      %35 = sbr.rel (0) target = $region17
    $region16: #{tpu_custom_call.1} parent=1 // pred_region
      %36 = dma.done [#allocation5], 2048
    $region17: #{tpu_custom_call.1} parent=1 // pred_fallthru
      _
    %v37 = vld [vmem:[#allocation2] sm:$0xff]
    %v38 = vld [vmem:[#allocation4] sm:$0xff]
    %v39 = vld [vmem:[#allocation4 + $0x8] sm:$0xff]
    %v40 = vld [vmem:[#allocation4 + $0x10] sm:$0xff]
    %v41 = vld [vmem:[#allocation4 + $0x18] sm:$0xff]
    %v42 = vld [vmem:[#allocation4 + $0x20] sm:$0xff]
    %v43 = vld [vmem:[#allocation4 + $0x28] sm:$0xff]
    %v44 = vld [vmem:[#allocation4 + $0x30] sm:$0xff]
    %v45 = vld [vmem:[#allocation4 + $0x38] sm:$0xff]
    %v46 = vld [vmem:[#allocation4 + $0x40] sm:$0xff]
    %v47 = vld [vmem:[#allocation4 + $0x48] sm:$0xff]
    %v48 = vld [vmem:[#allocation4 + $0x50] sm:$0xff]
    %v49 = vld [vmem:[#allocation4 + $0x58] sm:$0xff]
    %v50 = vld [vmem:[#allocation4 + $0x60] sm:$0xff]
    %v51 = vld [vmem:[#allocation4 + $0x68] sm:$0xff]
    %v52 = vld [vmem:[#allocation4 + $0x70] sm:$0xff]
    %v53 = vld [vmem:[#allocation4 + $0x78] sm:$0xff]
    %54 = vmatprep.subr.mxu0 0.0
    %55 = vmatpush1.msra.mxu0 %v38
    %56 = vmatprep.subr.mxu0 0.0
    %57 = vmatpush1.msra.mxu0 %v39
    %58 = vmatprep.subr.mxu0 0.0
    %59 = vmatpush1.msra.mxu0 %v40
    %60 = vmatprep.subr.mxu0 0.0
    %61 = vmatpush1.msra.mxu0 %v41
    %62 = vmatprep.subr.mxu0 0.0
    %63 = vmatpush1.msra.mxu0 %v42
    %64 = vmatprep.subr.mxu0 0.0
    %65 = vmatpush1.msra.mxu0 %v43
    %66 = vmatprep.subr.mxu0 0.0
    %67 = vmatpush1.msra.mxu0 %v44
    %68 = vmatprep.subr.mxu0 0.0
    %69 = vmatpush1.msra.mxu0 %v45
    %70 = vmatprep.subr.mxu0 0.0
    %71 = vmatpush1.msra.mxu0 %v46
    %72 = vmatprep.subr.mxu0 0.0
    %73 = vmatpush1.msra.mxu0 %v47
    %74 = vmatprep.subr.mxu0 0.0
    %75 = vmatpush1.msra.mxu0 %v48
    %76 = vmatprep.subr.mxu0 0.0
    %77 = vmatpush1.msra.mxu0 %v49
    %78 = vmatprep.subr.mxu0 0.0
    %79 = vmatpush1.msra.mxu0 %v50
    %80 = vmatprep.subr.mxu0 0.0
    %81 = vmatpush1.msra.mxu0 %v51
    %82 = vmatprep.subr.mxu0 0.0
    %83 = vmatpush1.msra.mxu0 %v52
    %84 = vmatprep.subr.mxu0 0.0
    %85 = vmatpush1.msra.mxu0 %v53
    %86 = vmatprep.subr.mxu0 0.0
    %87 = vmatpush1.msra.mxu0 0.0
    %88 = vmatprep.subr.mxu0 0.0
    %89 = vmatpush1.msra.mxu0 0.0
    %90 = vmatprep.subr.mxu0 0.0
    %91 = vmatpush1.msra.mxu0 0.0
    %92 = vmatprep.subr.mxu0 0.0
    %93 = vmatpush1.msra.mxu0 0.0
    %94 = vmatprep.subr.mxu0 0.0
    %95 = vmatpush1.msra.mxu0 0.0
    %96 = vmatprep.subr.mxu0 0.0
    %97 = vmatpush1.msra.mxu0 0.0
    %98 = vmatprep.subr.mxu0 0.0
    %99 = vmatpush1.msra.mxu0 0.0
    %100 = vmatprep.subr.mxu0 0.0
    %101 = vmatpush1.msra.mxu0 0.0
    %102 = vmatprep.subr.mxu0 0.0
    %103 = vmatpush1.msra.mxu0 0.0
    %104 = vmatprep.subr.mxu0 0.0
    %105 = vmatpush1.msra.mxu0 0.0
    %106 = vmatprep.subr.mxu0 0.0
    %107 = vmatpush1.msra.mxu0 0.0
    %108 = vmatprep.subr.mxu0 0.0
    %109 = vmatpush1.msra.mxu0 0.0
    %110 = vmatprep.subr.mxu0 0.0
    %111 = vmatpush1.msra.mxu0 0.0
    %112 = vmatprep.subr.mxu0 0.0
    %113 = vmatpush1.msra.mxu0 0.0
    %114 = vmatprep.subr.mxu0 0.0
    %115 = vmatpush1.msra.mxu0 0.0
    %116 = vmatprep.subr.mxu0 0.0
    %117 = vmatpush1.msra.mxu0 0.0
    %118 = vmatprep.mubr.f32.mxu0 0.0
    %119 = vmatmul.mubr.f32.gmra.mrb[0].mxu0 %v37
    %v120 = vpop.f32.mrb[0].mxu0
    %v121 = vadd.f32 0.0, %v120
    %v122 = vpop.f32.mrb[0].mxu0
    %123 = vdwg.mxu0
    %vm124 = vcmask 31744
    %125 = vst.msk [vmem:[%s2] sm:$0xff] %vm124, %v121
    // Predicated region
    $region18: #{tpu_custom_call.1} parent=1 // pred_check
      _
    $region19: #{tpu_custom_call.1} parent=1 // pred_check_branch
      %127 = sbr.rel (0) target = $region21
    $region20: #{tpu_custom_call.1} parent=1 // pred_region
      _
    $region21: #{tpu_custom_call.1} parent=1 // pred_fallthru
      _
    // Predicated region
    $region22: #{tpu_custom_call.1} parent=1 // pred_check
      _
    $region23: #{tpu_custom_call.1} parent=1 // pred_check_branch
      %129 = sbr.rel (0) target = $region25
    $region24: #{tpu_custom_call.1} parent=1 // pred_region
      _
    $region25: #{tpu_custom_call.1} parent=1 // pred_fallthru
      _
    %130 = vsyncpa [#allocation3], 1
    %131 = vsyncpa [#allocation5], 1

</llo_original>
